<compile_context>
chip_gen: v5e
topology: v5e:2x2
jax: 0.10.0
libtpu: 0.0.40
codegen_flags: <defaults>
</compile_context>

<pallas_src>
import functools

import jax
import jax.numpy as jnp
from jax import lax
from jax.experimental import pallas as pl
from jax.experimental.pallas import tpu as pltpu


def _sdpa_kernel(*refs, scale, has_mask, emit_attn):
    """refs = (q, k, v, [mask], out, [attn]); leading (1,1) block dims squeezed by [0,0]."""
    q_ref, k_ref, v_ref = refs[0], refs[1], refs[2]
    pos = 3
    mask_ref = None
    if has_mask:
        mask_ref = refs[pos]
        pos += 1
    out_ref = refs[pos]
    pos += 1
    attn_ref = refs[pos] if emit_attn else None

    q = q_ref[0, 0]                                   # (TQ, Dk)
    k = k_ref[0, 0]                                   # (Lk, Dk)
    v = v_ref[0, 0]                                   # (Lk, Dv)

    # scores = (q * scale) @ k^T -- contraction over the last dim of both
    # operands, no explicit transpose of k (no XLU vxpose).
    scores = lax.dot_general(
        q * jnp.asarray(scale, dtype=q.dtype),
        k,
        dimension_numbers=(((1,), (1,)), ((), ())),
        preferred_element_type=jnp.float32,
    )                                                 # (TQ, Lk) f32

    if has_mask:
        m = mask_ref[0, 0]                            # (TQm, Lkm) int8, broadcasts on VPU
        scores = jnp.where(m != 0, jnp.float32(-1000000000.0), scores)

    # numerically stable softmax over the key axis
    smax = jnp.max(scores, axis=-1, keepdims=True)
    e = jnp.exp(scores - smax)
    denom = jnp.sum(e, axis=-1, keepdims=True)
    attn = e * pl.reciprocal(denom, approx=True)      # EUP vrcp

    # dropout(attn) -> identity in eval mode

    out = jnp.dot(attn.astype(v.dtype), v,
                  preferred_element_type=jnp.float32)  # (TQ, Dv)

    out_ref[0, 0] = out.astype(out_ref.dtype)
    if emit_attn:
        attn_ref[0, 0] = attn.astype(attn_ref.dtype)


def _pick_q_tile(lq, lk):
    """Lk-aware query tile so TQ*Lk intermediates fit VMEM (incl. 64 MiB v7x)."""
    if lk >= 8192:
        target = 64
    elif lk >= 4096:
        target = 128
    else:
        target = 256
    if lq <= target:
        return lq          # full dim: always a legal block (full-extent escape)
    return target          # multiple of 32: sublane-aligned for f32/bf16/int8


def _vmem_limit_bytes():
    """3/4 of physical VMEM: ~96 MiB on v5e/v6e, ~48 MiB on v7x."""
    try:
        cap = int(pltpu.get_tpu_info().vmem_capacity_bytes)
    except Exception:
        cap = 64 * 1024 * 1024
    return (cap * 3) // 4


def scaled_dot_product_attention(q, k, v, mask=None, *, temperature,
                                 return_attn=True, attn_dtype=None):
    """q:(B,H,Lq,Dk) k:(B,H,Lk,Dk) v:(B,H,Lk,Dv); mask broadcastable to (B,H,Lq,Lk)."""
    B, H, Lq, Dk = q.shape
    Lk = k.shape[2]
    Dv = v.shape[3]
    scale = 1.0 / float(temperature)
    attn_dtype = q.dtype if attn_dtype is None else jnp.dtype(attn_dtype)

    TQ = _pick_q_tile(Lq, Lk)
    nq = pl.cdiv(Lq, TQ)
    Lq_pad = nq * TQ

    q_in = q
    if Lq_pad != Lq:
        q_in = jnp.pad(q, ((0, 0), (0, 0), (0, Lq_pad - Lq), (0, 0)))

    grid = (B, H, nq)

    # K/V block index is constant along qi -> Pallas skips redundant DMAs.
    in_specs = [
        pl.BlockSpec((1, 1, TQ, Dk), lambda b, h, qi: (b, h, qi, 0)),
        pl.BlockSpec((1, 1, Lk, Dk), lambda b, h, qi: (b, h, 0, 0)),
        pl.BlockSpec((1, 1, Lk, Dv), lambda b, h, qi: (b, h, 0, 0)),
    ]
    operands = [q_in, k, v]

    has_mask = mask is not None
    mask_bytes = 0
    if has_mask:
        # Keep the mask at its ORIGINAL extent (no HBM replication over B/H/Lq/Lk);
        # int8 storage; batch/head/query broadcast handled by index_map, and the
        # remaining size-1 axes broadcast for free inside the kernel on the VPU.
        mask = jnp.asarray(mask)
        while mask.ndim < 4:
            mask = mask[None]
        Bm, Hm, Lqm, Lkm = mask.shape
        mask_i8 = mask.astype(jnp.int8)
        if Lqm != 1 and Lq_pad != Lq:
            mask_i8 = jnp.pad(mask_i8, ((0, 0), (0, 0), (0, Lq_pad - Lq), (0, 0)))
        TQm = TQ if Lqm != 1 else 1

        def mask_index_map(b, h, qi, _bm=Bm, _hm=Hm, _lqm=Lqm):
            return (b if _bm > 1 else 0,
                    h if _hm > 1 else 0,
                    qi if _lqm > 1 else 0,
                    0)

        in_specs.append(pl.BlockSpec((1, 1, TQm, Lkm), mask_index_map))
        operands.append(mask_i8)
        mask_bytes = int(mask_i8.size)  # int8 => 1 byte / element

    out_specs = [pl.BlockSpec((1, 1, TQ, Dv), lambda b, h, qi: (b, h, qi, 0))]
    out_shapes = [jax.ShapeDtypeStruct((B, H, Lq_pad, Dv), q.dtype)]
    if return_attn:
        out_specs.append(pl.BlockSpec((1, 1, TQ, Lk), lambda b, h, qi: (b, h, qi, 0)))
        out_shapes.append(jax.ShapeDtypeStruct((B, H, Lq_pad, Lk), attn_dtype))

    itemsize = jnp.dtype(q.dtype).itemsize
    bytes_accessed = (q.size * itemsize + k.size * jnp.dtype(k.dtype).itemsize
                      + v.size * jnp.dtype(v.dtype).itemsize + mask_bytes
                      + B * H * Lq * Dv * itemsize
                      + (B * H * Lq * Lk * jnp.dtype(attn_dtype).itemsize
                         if return_attn else 0))
    cost = pl.CostEstimate(
        flops=2 * B * H * Lq * Lk * (Dk + Dv),
        transcendentals=B * H * Lq * Lk,
        bytes_accessed=int(bytes_accessed),
    )

    kernel = functools.partial(_sdpa_kernel, scale=scale,
                               has_mask=has_mask, emit_attn=return_attn)

    results = pl.pallas_call(
        kernel,
        out_shape=tuple(out_shapes),
        grid_spec=pltpu.PrefetchScalarGridSpec(
            num_scalar_prefetch=0,
            grid=grid,
            in_specs=in_specs,
            out_specs=out_specs,
        ),
        compiler_params=pltpu.CompilerParams(
            # qi marked "arbitrary" so megacore shards B/H only, preserving the
            # K/V DMA-skip reuse across consecutive qi steps (measured neutral cost).
            dimension_semantics=("parallel", "parallel", "arbitrary"),
            vmem_limit_bytes=_vmem_limit_bytes(),
        ),
        cost_estimate=cost,
    )(*operands)

    if return_attn:
        out, attn = results
    else:
        (out,) = results
        attn = None

    if Lq_pad != Lq:
        out = out[:, :, :Lq, :]
        if return_attn:
            attn = attn[:, :, :Lq, :]

    if return_attn:
        return out, attn
    return out


def _reference(q, k, v, mask, temperature):
    attn = jnp.einsum("bhqd,bhkd->bhqk", q / temperature, k)
    if mask is not None:
        attn = jnp.where(mask, -1000000000.0, attn)
    attn = jax.nn.softmax(attn, axis=-1)
    out = jnp.einsum("bhqk,bhkd->bhqd", attn, v)
    return out, attn


if __name__ == "__main__":
    key = jax.random.PRNGKey(0)
    kq, kk, kv, km, kp = jax.random.split(key, 5)

    B, H, Lq, Lk, Dk, Dv = 2, 2, 8, 8, 32, 32
    temperature = float(Dk) ** 0.5

    q = jax.random.normal(kq, (B, H, Lq, Dk), dtype=jnp.float32)
    k = jax.random.normal(kk, (B, H, Lk, Dk), dtype=jnp.float32)
    v = jax.random.normal(kv, (B, H, Lk, Dv), dtype=jnp.float32)
    # Boolean attention mask (True => masked out), broadcast over heads.
    mask = jax.random.bernoulli(km, 0.25, (B, 1, Lq, Lk))
    # Key-padding style mask (B,1,1,Lk): exercises un-replicated Lq broadcast.
    pad_mask = jax.random.bernoulli(kp, 0.25, (B, 1, 1, Lk))

    # 1) masked variant (full-rank mask over Lq)
    out, attn = scaled_dot_product_attention(q, k, v, mask, temperature=temperature)
    jax.block_until_ready((out, attn))
    out_ref, attn_ref = _reference(q, k, v, mask, temperature)
    assert jnp.allclose(out, out_ref, atol=2e-3, rtol=2e-3)
    assert jnp.allclose(attn, attn_ref, atol=2e-3, rtol=2e-3)

    # 2) key-padding mask (B,1,1,Lk): no HBM replication over Lq, in-kernel broadcast
    out_p, attn_p = scaled_dot_product_attention(q, k, v, pad_mask, temperature=temperature)
    jax.block_until_ready((out_p, attn_p))
    out_pref, attn_pref = _reference(q, k, v, pad_mask, temperature)
    assert jnp.allclose(out_p, out_pref, atol=2e-3, rtol=2e-3)
    assert jnp.allclose(attn_p, attn_pref, atol=2e-3, rtol=2e-3)

    # 3) no-mask variant (no dummy mask DMA)
    out2, attn2 = scaled_dot_product_attention(q, k, v, None, temperature=temperature)
    jax.block_until_ready((out2, attn2))
    out_ref2, attn_ref2 = _reference(q, k, v, None, temperature)
    assert jnp.allclose(out2, out_ref2, atol=2e-3, rtol=2e-3)
    assert jnp.allclose(attn2, attn_ref2, atol=2e-3, rtol=2e-3)

    # 4) attn-weights writeback dropped entirely when the caller does not need it
    out3 = scaled_dot_product_attention(q, k, v, mask, temperature=temperature,
                                        return_attn=False)
    jax.block_until_ready(out3)
    assert jnp.allclose(out3, out_ref, atol=2e-3, rtol=2e-3)

    print("KERNEL_OK")
</pallas_src>

<mosaic_0001>
module attributes {stable_mosaic.version = 11 : i64} {
  func.func @_sdpa_kernel(%arg0: i32, %arg1: i32, %arg2: i32, %arg3: memref<1x1x8x32xf32, #tpu.memory_space<vmem>>, %arg4: memref<1x1x8x32xf32, #tpu.memory_space<vmem>>, %arg5: memref<1x1x8x32xf32, #tpu.memory_space<vmem>>, %arg6: memref<1x1x8x8xi8, #tpu.memory_space<vmem>>, %arg7: memref<1x1x8x32xf32, #tpu.memory_space<vmem>>, %arg8: memref<1x1x8x8xf32, #tpu.memory_space<vmem>>) attributes {dimension_semantics = [#tpu.dimension_semantics<parallel>, #tpu.dimension_semantics<parallel>, #tpu.dimension_semantics<arbitrary>], iteration_bounds = array<i64: 2, 2, 1>, scalar_prefetch = 0 : i64, scratch_operands = 0 : i64, tpu.core_type = #tpu.core_type<tc>, window_params = [{transform_indices = @transform_0, window_bounds = array<i64: 1, 1, 8, 32>}, {transform_indices = @transform_1, window_bounds = array<i64: 1, 1, 8, 32>}, {transform_indices = @transform_2, window_bounds = array<i64: 1, 1, 8, 32>}, {transform_indices = @transform_3, window_bounds = array<i64: 1, 1, 8, 8>}, {transform_indices = @transform_4, window_bounds = array<i64: 1, 1, 8, 32>}, {transform_indices = @transform_5, window_bounds = array<i64: 1, 1, 8, 8>}]} {
    %c0 = arith.constant 0 : index
    %c0_0 = arith.constant 0 : index
    %c0_1 = arith.constant 0 : index
    %c0_2 = arith.constant 0 : index
    %0 = vector.load %arg3[%c0, %c0_0, %c0_1, %c0_2] : memref<1x1x8x32xf32, #tpu.memory_space<vmem>>, vector<1x1x8x32xf32>
    %1 = vector.shape_cast %0 : vector<1x1x8x32xf32> to vector<8x32xf32>
    %c0_3 = arith.constant 0 : index
    %c0_4 = arith.constant 0 : index
    %c0_5 = arith.constant 0 : index
    %c0_6 = arith.constant 0 : index
    %2 = vector.load %arg4[%c0_3, %c0_4, %c0_5, %c0_6] : memref<1x1x8x32xf32, #tpu.memory_space<vmem>>, vector<1x1x8x32xf32>
    %3 = vector.shape_cast %2 : vector<1x1x8x32xf32> to vector<8x32xf32>
    %c0_7 = arith.constant 0 : index
    %c0_8 = arith.constant 0 : index
    %c0_9 = arith.constant 0 : index
    %c0_10 = arith.constant 0 : index
    %4 = vector.load %arg5[%c0_7, %c0_8, %c0_9, %c0_10] : memref<1x1x8x32xf32, #tpu.memory_space<vmem>>, vector<1x1x8x32xf32>
    %5 = vector.shape_cast %4 : vector<1x1x8x32xf32> to vector<8x32xf32>
    %cst = arith.constant 0.176776692 : f32
    %6 = vector.broadcast %cst : f32 to vector<8x32xf32>
    %7 = arith.mulf %1, %6 : vector<8x32xf32>
    %cst_11 = arith.constant dense<0.000000e+00> : vector<8x8xf32>
    %8 = tpu.matmul %7, %3, %cst_11 {dimension_numbers = #tpu.dot_dimension_numbers<[1], [1], [0], [0], [0, 0, 1, 0], [], []>} : vector<8x32xf32>, vector<8x32xf32>, vector<8x8xf32> -> vector<8x8xf32>
    %c0_12 = arith.constant 0 : index
    %c0_13 = arith.constant 0 : index
    %c0_14 = arith.constant 0 : index
    %c0_15 = arith.constant 0 : index
    %9 = vector.load %arg6[%c0_12, %c0_13, %c0_14, %c0_15] : memref<1x1x8x8xi8, #tpu.memory_space<vmem>>, vector<1x1x8x8xi8>
    %10 = vector.shape_cast %9 : vector<1x1x8x8xi8> to vector<8x8xi8>
    %c0_i8 = arith.constant 0 : i8
    %11 = vector.broadcast %c0_i8 : i8 to vector<8x8xi8>
    %12 = arith.cmpi ne, %10, %11 : vector<8x8xi8>
    %cst_16 = arith.constant -1.000000e+09 : f32
    %13 = vector.broadcast %cst_16 : f32 to vector<8x8xf32>
    %14 = arith.select %12, %13, %8 : vector<8x8xi1>, vector<8x8xf32>
    %cst_17 = arith.constant dense<0xFF800000> : vector<8xf32>
    %15 = vector.multi_reduction <maximumf>, %14, %cst_17 [1] : vector<8x8xf32> to vector<8xf32>
    %16 = vector.shape_cast %15 : vector<8xf32> to vector<8x1xf32>
    %17 = vector.broadcast %16 : vector<8x1xf32> to vector<8x8xf32>
    %18 = arith.subf %14, %17 : vector<8x8xf32>
    %19 = math.exp %18 : vector<8x8xf32>
    %cst_18 = arith.constant dense<0.000000e+00> : vector<8xf32>
    %20 = vector.multi_reduction <add>, %19, %cst_18 [1] : vector<8x8xf32> to vector<8xf32>
    %21 = vector.shape_cast %20 : vector<8xf32> to vector<8x1xf32>
    %22 = tpu.reciprocal %21 {approx = true} : vector<8x1xf32> -> vector<8x1xf32>
    %23 = vector.broadcast %22 : vector<8x1xf32> to vector<8x8xf32>
    %24 = arith.mulf %19, %23 : vector<8x8xf32>
    %cst_19 = arith.constant dense<0.000000e+00> : vector<8x32xf32>
    %25 = tpu.matmul %24, %5, %cst_19 {dimension_numbers = #tpu.dot_dimension_numbers<[1], [0], [0], [1], [0, 0, 1, 1], [], []>} : vector<8x8xf32>, vector<8x32xf32>, vector<8x32xf32> -> vector<8x32xf32>
    %c0_20 = arith.constant 0 : index
    %c0_21 = arith.constant 0 : index
    %c0_22 = arith.constant 0 : index
    %c0_23 = arith.constant 0 : index
    %26 = vector.load %arg7[%c0_20, %c0_21, %c0_22, %c0_23] : memref<1x1x8x32xf32, #tpu.memory_space<vmem>>, vector<1x1x8x32xf32>
    %27 = vector.shape_cast %26 : vector<1x1x8x32xf32> to vector<8x32xf32>
    %28 = vector.shape_cast %25 : vector<8x32xf32> to vector<1x1x8x32xf32>
    tpu.vector_store %arg7[%c0_20, %c0_21, %c0_22, %c0_23], %28 {strides = array<i32>} : memref<1x1x8x32xf32, #tpu.memory_space<vmem>>, vector<1x1x8x32xf32>,
    %c0_24 = arith.constant 0 : index
    %c0_25 = arith.constant 0 : index
    %c0_26 = arith.constant 0 : index
    %c0_27 = arith.constant 0 : index
    %29 = vector.load %arg8[%c0_24, %c0_25, %c0_26, %c0_27] : memref<1x1x8x8xf32, #tpu.memory_space<vmem>>, vector<1x1x8x8xf32>
    %30 = vector.shape_cast %29 : vector<1x1x8x8xf32> to vector<8x8xf32>
    %31 = vector.shape_cast %24 : vector<8x8xf32> to vector<1x1x8x8xf32>
    tpu.vector_store %arg8[%c0_24, %c0_25, %c0_26, %c0_27], %31 {strides = array<i32>} : memref<1x1x8x8xf32, #tpu.memory_space<vmem>>, vector<1x1x8x8xf32>,
    return
  }
  func.func @transform_0(%arg0: i32, %arg1: i32, %arg2: i32) -> (i32, i32, i32, i32) {
    %c0_i32 = arith.constant 0 : i32
    %c0_i32_0 = arith.constant 0 : i32
    return %arg0, %arg1, %arg2, %c0_i32 : i32, i32, i32, i32
  }
  func.func @transform_1(%arg0: i32, %arg1: i32, %arg2: i32) -> (i32, i32, i32, i32) {
    %c0_i32 = arith.constant 0 : i32
    %c0_i32_0 = arith.constant 0 : i32
    %c0_i32_1 = arith.constant 0 : i32
    return %arg0, %arg1, %c0_i32, %c0_i32_0 : i32, i32, i32, i32
  }
  func.func @transform_2(%arg0: i32, %arg1: i32, %arg2: i32) -> (i32, i32, i32, i32) {
    %c0_i32 = arith.constant 0 : i32
    %c0_i32_0 = arith.constant 0 : i32
    %c0_i32_1 = arith.constant 0 : i32
    return %arg0, %arg1, %c0_i32, %c0_i32_0 : i32, i32, i32, i32
  }
  func.func @transform_3(%arg0: i32, %arg1: i32, %arg2: i32) -> (i32, i32, i32, i32) {
    %c0_i32 = arith.constant 0 : i32
    %c0_i32_0 = arith.constant 0 : i32
    %c0_i32_1 = arith.constant 0 : i32
    return %arg0, %c0_i32, %arg2, %c0_i32_0 : i32, i32, i32, i32
  }
  func.func @transform_4(%arg0: i32, %arg1: i32, %arg2: i32) -> (i32, i32, i32, i32) {
    %c0_i32 = arith.constant 0 : i32
    %c0_i32_0 = arith.constant 0 : i32
    return %arg0, %arg1, %arg2, %c0_i32 : i32, i32, i32, i32
  }
  func.func @transform_5(%arg0: i32, %arg1: i32, %arg2: i32) -> (i32, i32, i32, i32) {
    %c0_i32 = arith.constant 0 : i32
    %c0_i32_0 = arith.constant 0 : i32
    return %arg0, %arg1, %arg2, %c0_i32 : i32, i32, i32, i32
  }
}

</mosaic_0001>

<llo_original>
// kernel: tpu_custom_call.1
$region0: #{tpu_custom_call.1}
  #allocation0 [shape = 'u32[]', space=smem, size = 0x4, offset = 0x4, fixed_abs, tag = 'smem constant byte address 0x4 - core index']
  #allocation1 [shape = 'u32[72,128]{1,0:T(1,128)}', space=vmem, size = 0x9000, scoped, tag = 'internal scratch']
  %s0 = inlined_call_operand.hbm [shape: f32[2,2,8,32], index: 0, kind: input, shape index: {}]
  %s1 = inlined_call_operand.hbm [shape: f32[2,2,8,32], index: 1, kind: input, shape index: {}]
  %s2 = inlined_call_operand.hbm [shape: f32[2,2,8,32], index: 2, kind: input, shape index: {}]
  %s3 = inlined_call_operand.hbm [shape: s8[2,1,8,8], index: 3, kind: input, shape index: {}]
  %s4 = inlined_call_operand.hbm [shape: f32[2,2,8,32], index: 4, kind: output, shape index: {0}]
  %s5 = inlined_call_operand.hbm [shape: f32[2,2,8,8], index: 5, kind: output, shape index: {1}]
  %6 = xla_tuple %s4, %s5
  %s7 = sld [smem:[#allocation0]]
  $region73: #{tpu_custom_call.1} parent=0
    _
  %s9 = ssub.s32 1, %s7
  %s10 = scalar_select 0, %s9, %s7
  $region1: #{tpu_custom_call.1} parent=0
    #allocation2 [shape = 'u8[8192]{0}', space=vmem, size = 0x2000, scoped, tag = 'input window, operand 0']
    #allocation3 [shape = 's32[2]{0}', space=sflag, size = 0x8, scoped, tag = 'scoped memory for tpu_custom_call.1']
    #allocation4 [shape = 's32[2]{0}', space=sflag, size = 0x8, scoped, tag = 'scoped memory for tpu_custom_call.1']
    #allocation5 [shape = 'u8[8192]{0}', space=vmem, size = 0x2000, scoped, tag = 'input window, operand 1']
    #allocation6 [shape = 's32[2]{0}', space=sflag, size = 0x8, scoped, tag = 'scoped memory for tpu_custom_call.1']
    #allocation7 [shape = 'u8[8192]{0}', space=vmem, size = 0x2000, scoped, tag = 'input window, operand 2']
    #allocation8 [shape = 'u8[2048]{0}', space=vmem, size = 0x800, scoped, tag = 'input window, operand 3']
    #allocation9 [shape = 's32[2]{0}', space=sflag, size = 0x8, scoped, tag = 'scoped memory for tpu_custom_call.1']
    #allocation10 [shape = 'u8[8192]{0}', space=vmem, size = 0x2000, scoped, tag = 'output window, operand 0']
    #allocation11 [shape = 'u8[8192]{0}', space=vmem, size = 0x2000, scoped, tag = 'output window, operand 1']
    #allocation12 [shape = 's32[2]{0}', space=sflag, size = 0x8, scoped, tag = 'scoped memory for tpu_custom_call.1']
    %11 = vsyncpa [#allocation3], 0
    %s12 = scalar_lea.sflag [#allocation3], 1
    %13 = vsyncpa %s12, 0
    %14 = vsyncpa [#allocation6], 0
    %s15 = scalar_lea.sflag [#allocation6], 1
    %16 = vsyncpa %s15, 0
    %17 = vsyncpa [#allocation9], 0
    %s18 = scalar_lea.sflag [#allocation9], 1
    %19 = vsyncpa %s18, 0
    %20 = vsyncpa [#allocation4], 0
    %s21 = scalar_lea.sflag [#allocation4], 1
    %22 = vsyncpa %s21, 0
    %23 = vsyncpa [#allocation12], 0
    %s24 = scalar_lea.sflag [#allocation12], 1
    %25 = vsyncpa %s24, 0
    loop: start=0, step=1, limit=6
    $region2: #{tpu_custom_call.1} parent=1 // loop_pre_header
      _
    $region3: #{tpu_custom_call.1} parent=1 // loop_header
      %s27 = sphi 0, %s31
      %p28 = scmp.ge.s32.totalorder %s27, 6
      %s34 = sphi 0, %s53
      %s35 = sphi 0, %s49
      %s36 = sphi 0, %s45
      %s37 = sphi 0, %s34
      %s38 = sphi 0, %s35
      %s39 = sphi 0, %s36
      %s40 = sphi 0, %s37
      %s41 = sphi 0, %s38
      %s42 = sphi 0, %s39
      %s60 = sphi 0, %s62
      %s63 = sphi 0, %s60
      %s64 = sphi 0, %s63
      %s80 = sphi 0, %s64
      %s88 = sphi 0, %s90
      %s91 = sphi 0, %s88
      %s92 = sphi 0, %s91
      %s108 = sphi 0, %s92
      %s116 = sphi 0, %s118
      %s119 = sphi 0, %s116
      %s120 = sphi 0, %s119
      %s136 = sphi 0, %s120
      %s144 = sphi 0, %s146
      %s147 = sphi 0, %s144
      %s148 = sphi 0, %s147
      %s164 = sphi 0, %s148
      %s174 = sphi 0, %s176
      %s177 = sphi 0, %s174
      %s178 = sphi 0, %s177
      %s194 = sphi 0, %s178
      %s204 = sphi 0, %s206
      %s207 = sphi 0, %s204
      %s208 = sphi 0, %s207
      %s224 = sphi 0, %s208
    $region4: #{tpu_custom_call.1} parent=1 // loop_header_branch
      %30 = sbr.rel (%p28) target = $region8
    $region5: #{tpu_custom_call.1} parent=1 // loop_body
      %s32 = ssub.s32 %s27, 1
      %s33 = ssub.s32 %s27, 2
      %s43 = sadd.s32 1, %s36
      %p44 = scmp.ge.s32.totalorder %s43, 1
      %s45 = scalar_select %p44, 0, %s43
      %s46 = sadd.s32 1, %s35
      %s47 = scalar_select %p44, %s46, %s35
      %p48 = scmp.ge.s32.totalorder %s47, 2
      %s49 = scalar_select %p48, 0, %s47
      %s50 = sadd.s32 1, %s34
      %s51 = scalar_select %p48, %s50, %s34
      %p52 = scmp.ge.s32.totalorder %s51, 2
      %s53 = scalar_select %p52, 0, %s51
      %s54 = ssub.s32 %s34, %s53
      %s55 = ssub.s32 %s35, %s49
      %s56 = sor.u32 %s54, %s55
      %s57 = ssub.s32 %s36, %s45
      %s58 = sor.u32 %s56, %s57
      %p59 = scmp.eq.s32.totalorder %s58, 0
      %s61 = sadd.s32 %s60, 1
      %s62 = scalar_select %p59, %s60, %s61
      %p65 = pneg %p59
      %p66 = scmp.eq.s32.totalorder %s27, 3
      %p67 = por %p65, %p66
      %p68 = scmp.ne.s32.totalorder %s60, %s63
      %p69 = scmp.eq.s32.totalorder %s27, 0
      %p70 = por %p68, %p69
      %p71 = scmp.ne.s32.totalorder %s60, %s63
      %p72 = scmp.eq.s32.totalorder %s32, 3
      %p73 = por %p71, %p72
      %p74 = scmp.ne.s32.totalorder %s63, %s64
      %p75 = scmp.eq.s32.totalorder %s32, 0
      %p76 = por %p74, %p75
      %p77 = scmp.ne.s32.totalorder %s63, %s64
      %p78 = scmp.eq.s32.totalorder %s33, 3
      %p79 = por %p77, %p78
      %p81 = scmp.ne.s32.totalorder %s64, %s80
      %p82 = scmp.eq.s32.totalorder %s33, 0
      %p83 = por %p81, %p82
      %s84 = ssub.s32 %s34, %s53
      %s85 = ssub.s32 %s35, %s49
      %s86 = sor.u32 %s84, %s85
      %p87 = scmp.eq.s32.totalorder %s86, 0
      %s89 = sadd.s32 %s88, 1
      %s90 = scalar_select %p87, %s88, %s89
      %p93 = pneg %p87
      %p94 = scmp.eq.s32.totalorder %s27, 3
      %p95 = por %p93, %p94
      %p96 = scmp.ne.s32.totalorder %s88, %s91
      %p97 = scmp.eq.s32.totalorder %s27, 0
      %p98 = por %p96, %p97
      %p99 = scmp.ne.s32.totalorder %s88, %s91
      %p100 = scmp.eq.s32.totalorder %s32, 3
      %p101 = por %p99, %p100
      %p102 = scmp.ne.s32.totalorder %s91, %s92
      %p103 = scmp.eq.s32.totalorder %s32, 0
      %p104 = por %p102, %p103
      %p105 = scmp.ne.s32.totalorder %s91, %s92
      %p106 = scmp.eq.s32.totalorder %s33, 3
      %p107 = por %p105, %p106
      %p109 = scmp.ne.s32.totalorder %s92, %s108
      %p110 = scmp.eq.s32.totalorder %s33, 0
      %p111 = por %p109, %p110
      %s112 = ssub.s32 %s34, %s53
      %s113 = ssub.s32 %s35, %s49
      %s114 = sor.u32 %s112, %s113
      %p115 = scmp.eq.s32.totalorder %s114, 0
      %s117 = sadd.s32 %s116, 1
      %s118 = scalar_select %p115, %s116, %s117
      %p121 = pneg %p115
      %p122 = scmp.eq.s32.totalorder %s27, 3
      %p123 = por %p121, %p122
      %p124 = scmp.ne.s32.totalorder %s116, %s119
      %p125 = scmp.eq.s32.totalorder %s27, 0
      %p126 = por %p124, %p125
      %p127 = scmp.ne.s32.totalorder %s116, %s119
      %p128 = scmp.eq.s32.totalorder %s32, 3
      %p129 = por %p127, %p128
      %p130 = scmp.ne.s32.totalorder %s119, %s120
      %p131 = scmp.eq.s32.totalorder %s32, 0
      %p132 = por %p130, %p131
      %p133 = scmp.ne.s32.totalorder %s119, %s120
      %p134 = scmp.eq.s32.totalorder %s33, 3
      %p135 = por %p133, %p134
      %p137 = scmp.ne.s32.totalorder %s120, %s136
      %p138 = scmp.eq.s32.totalorder %s33, 0
      %p139 = por %p137, %p138
      %s140 = ssub.s32 %s34, %s53
      %s141 = ssub.s32 %s36, %s45
      %s142 = sor.u32 %s140, %s141
      %p143 = scmp.eq.s32.totalorder %s142, 0
      %s145 = sadd.s32 %s144, 1
      %s146 = scalar_select %p143, %s144, %s145
      %p149 = pneg %p143
      %p150 = scmp.eq.s32.totalorder %s27, 3
      %p151 = por %p149, %p150
      %p152 = scmp.ne.s32.totalorder %s144, %s147
      %p153 = scmp.eq.s32.totalorder %s27, 0
      %p154 = por %p152, %p153
      %p155 = scmp.ne.s32.totalorder %s144, %s147
      %p156 = scmp.eq.s32.totalorder %s32, 3
      %p157 = por %p155, %p156
      %p158 = scmp.ne.s32.totalorder %s147, %s148
      %p159 = scmp.eq.s32.totalorder %s32, 0
      %p160 = por %p158, %p159
      %p161 = scmp.ne.s32.totalorder %s147, %s148
      %p162 = scmp.eq.s32.totalorder %s33, 3
      %p163 = por %p161, %p162
      %p165 = scmp.ne.s32.totalorder %s148, %s164
      %p166 = scmp.eq.s32.totalorder %s33, 0
      %p167 = por %p165, %p166
      %s168 = ssub.s32 %s34, %s53
      %s169 = ssub.s32 %s35, %s49
      %s170 = sor.u32 %s168, %s169
      %s171 = ssub.s32 %s36, %s45
      %s172 = sor.u32 %s170, %s171
      %p173 = scmp.eq.s32.totalorder %s172, 0
      %s175 = sadd.s32 %s174, 1
      %s176 = scalar_select %p173, %s174, %s175
      %p179 = pneg %p173
      %p180 = scmp.eq.s32.totalorder %s27, 3
      %p181 = por %p179, %p180
      %p182 = scmp.ne.s32.totalorder %s174, %s177
      %p183 = scmp.eq.s32.totalorder %s27, 0
      %p184 = por %p182, %p183
      %p185 = scmp.ne.s32.totalorder %s174, %s177
      %p186 = scmp.eq.s32.totalorder %s32, 3
      %p187 = por %p185, %p186
      %p188 = scmp.ne.s32.totalorder %s177, %s178
      %p189 = scmp.eq.s32.totalorder %s32, 0
      %p190 = por %p188, %p189
      %p191 = scmp.ne.s32.totalorder %s177, %s178
      %p192 = scmp.eq.s32.totalorder %s33, 3
      %p193 = por %p191, %p192
      %p195 = scmp.ne.s32.totalorder %s178, %s194
      %p196 = scmp.eq.s32.totalorder %s33, 0
      %p197 = por %p195, %p196
      %s198 = ssub.s32 %s34, %s53
      %s199 = ssub.s32 %s35, %s49
      %s200 = sor.u32 %s198, %s199
      %s201 = ssub.s32 %s36, %s45
      %s202 = sor.u32 %s200, %s201
      %p203 = scmp.eq.s32.totalorder %s202, 0
      %s205 = sadd.s32 %s204, 1
      %s206 = scalar_select %p203, %s204, %s205
      %p209 = pneg %p203
      %p210 = scmp.eq.s32.totalorder %s27, 3
      %p211 = por %p209, %p210
      %p212 = scmp.ne.s32.totalorder %s204, %s207
      %p213 = scmp.eq.s32.totalorder %s27, 0
      %p214 = por %p212, %p213
      %p215 = scmp.ne.s32.totalorder %s204, %s207
      %p216 = scmp.eq.s32.totalorder %s32, 3
      %p217 = por %p215, %p216
      %p218 = scmp.ne.s32.totalorder %s207, %s208
      %p219 = scmp.eq.s32.totalorder %s32, 0
      %p220 = por %p218, %p219
      %p221 = scmp.ne.s32.totalorder %s207, %s208
      %p222 = scmp.eq.s32.totalorder %s33, 3
      %p223 = por %p221, %p222
      %p225 = scmp.ne.s32.totalorder %s208, %s224
      %p226 = scmp.eq.s32.totalorder %s33, 0
      %p227 = por %p225, %p226
      %p228 = scmp.le.s32.totalorder 1, %s27
      %p229 = scmp.lt.s32.totalorder %s27, 5
      %p230 = pnand %p228, %p229
      %p231 = pneg %p230
      // Predicated region
      $region9: #{tpu_custom_call.1} parent=5 // pred_check
        _
      $region10: #{tpu_custom_call.1} parent=5 // pred_check_branch
        %233 = sbr.rel (%p230) target = $region12
      $region11: #{tpu_custom_call.1} parent=5 // pred_region
        %s234 = ssub.s32 %s27, 1
      $region12: #{tpu_custom_call.1} parent=5 // pred_fallthru
        _
      %p235 = scmp.lt.s32.totalorder %s27, 4
      // Predicated region
      $region13: #{tpu_custom_call.1} parent=5 // pred_check
        %p236 = pneg %p235
      $region14: #{tpu_custom_call.1} parent=5 // pred_check_branch
        %238 = sbr.rel (%p236) target = $region16
      $region15: #{tpu_custom_call.1} parent=5 // pred_region
        // Predicated region
        $region17: #{tpu_custom_call.1} parent=15 // pred_check
          %p239 = pneg %p70
        $region18: #{tpu_custom_call.1} parent=15 // pred_check_branch
          %241 = sbr.rel (%p239) target = $region20
        $region19: #{tpu_custom_call.1} parent=15 // pred_region
          %s242 = sand.u32 %s60, 1
          %s243 = scalar_lea.sflag [#allocation3], %s242
          %s244 = sand.u32 %s60, 1
          %s245 = smul.addr %s244, 8
          %s246 = scalar_lea.vmem [#allocation2], %s245
          %248 = vsyncadd %s243, 0
          %s249 = sadd.s32 %s36, %s35
          %s250 = smul.addr %s34, 2
          %s251 = sadd.s32 %s249, %s250
          %s252 = smul.addr %s251, 8
          %s253 = scalar_lea.hbm %s0, %s252
          %s255 = sshll.u32 %s253, 4
          %s256 = int_to_ptr.hbm [resolvable:$true] %s255
          %s257 = sshll.u32 %s246, 4
          %s258 = int_to_ptr.vmem [resolvable:$true] %s257
          %260 = dma.hbm_to_vmem [thread:$0]  %s256, 128, %s258, %s243
        $region20: #{tpu_custom_call.1} parent=15 // pred_fallthru
          _
        // Predicated region
        $region21: #{tpu_custom_call.1} parent=15 // pred_check
          %p261 = pneg %p98
        $region22: #{tpu_custom_call.1} parent=15 // pred_check_branch
          %263 = sbr.rel (%p261) target = $region24
        $region23: #{tpu_custom_call.1} parent=15 // pred_region
          %s264 = sand.u32 %s27, 1
          %s265 = scalar_lea.sflag [#allocation6], %s264
          %s266 = sand.u32 %s88, 1
          %s267 = smul.addr %s266, 8
          %s268 = scalar_lea.vmem [#allocation5], %s267
          %270 = vsyncadd %s265, 0
          %s271 = smul.addr %s34, 2
          %s272 = sadd.s32 %s35, %s271
          %s273 = smul.addr %s272, 8
          %s274 = scalar_lea.hbm %s1, %s273
          %s276 = sshll.u32 %s274, 4
          %s277 = int_to_ptr.hbm [resolvable:$true] %s276
          %s278 = sshll.u32 %s268, 4
          %s279 = int_to_ptr.vmem [resolvable:$true] %s278
          %281 = dma.hbm_to_vmem [thread:$0]  %s277, 128, %s279, %s265
        $region24: #{tpu_custom_call.1} parent=15 // pred_fallthru
          _
        // Predicated region
        $region25: #{tpu_custom_call.1} parent=15 // pred_check
          %p282 = pneg %p126
        $region26: #{tpu_custom_call.1} parent=15 // pred_check_branch
          %284 = sbr.rel (%p282) target = $region28
        $region27: #{tpu_custom_call.1} parent=15 // pred_region
          %s285 = sand.u32 %s27, 1
          %s286 = scalar_lea.sflag [#allocation6], %s285
          %s287 = sand.u32 %s116, 1
          %s288 = smul.addr %s287, 8
          %s289 = scalar_lea.vmem [#allocation7], %s288
          %291 = vsyncadd %s286, 0
          %s292 = smul.addr %s34, 2
          %s293 = sadd.s32 %s35, %s292
          %s294 = smul.addr %s293, 8
          %s295 = scalar_lea.hbm %s2, %s294
          %s297 = sshll.u32 %s295, 4
          %s298 = int_to_ptr.hbm [resolvable:$true] %s297
          %s299 = sshll.u32 %s289, 4
          %s300 = int_to_ptr.vmem [resolvable:$true] %s299
          %302 = dma.hbm_to_vmem [thread:$0]  %s298, 128, %s300, %s286
        $region28: #{tpu_custom_call.1} parent=15 // pred_fallthru
          _
        // Predicated region
        $region29: #{tpu_custom_call.1} parent=15 // pred_check
          %p303 = pneg %p154
        $region30: #{tpu_custom_call.1} parent=15 // pred_check_branch
          %305 = sbr.rel (%p303) target = $region32
        $region31: #{tpu_custom_call.1} parent=15 // pred_region
          %s306 = sand.u32 %s144, 1
          %s307 = scalar_lea.sflag [#allocation9], %s306
          %s308 = sand.u32 %s144, 1
          %s309 = smul.addr %s308, 2
          %s310 = scalar_lea.vmem [#allocation8], %s309
          %312 = vsyncadd %s307, 0
          %s313 = sadd.s32 %s36, %s34
          %s314 = smul.addr %s313, 2
          %s315 = scalar_lea.hbm %s3, %s314
          %s317 = sshll.u32 %s315, 4
          %s318 = int_to_ptr.hbm [resolvable:$true] %s317
          %s319 = sshll.u32 %s310, 4
          %s320 = int_to_ptr.vmem [resolvable:$true] %s319
          %322 = dma.hbm_to_vmem [thread:$0]  %s318, 32, %s320, %s307
        $region32: #{tpu_custom_call.1} parent=15 // pred_fallthru
          _
      $region16: #{tpu_custom_call.1} parent=5 // pred_fallthru
        _
      %p323 = scmp.le.s32.totalorder 1, %s27
      %p324 = scmp.lt.s32.totalorder %s27, 5
      %p325 = pnand %p323, %p324
      %p326 = pneg %p325
      // Predicated region
      $region33: #{tpu_custom_call.1} parent=5 // pred_check
        _
      $region34: #{tpu_custom_call.1} parent=5 // pred_check_branch
        %328 = sbr.rel (%p325) target = $region36
      $region35: #{tpu_custom_call.1} parent=5 // pred_region
        %s329 = ssub.s32 %s27, 1
        %s330 = sand.u32 %s63, 1
        %s331 = scalar_lea.sflag [#allocation3], %s330
        %s332 = sand.u32 %s63, 1
        %s333 = smul.addr %s332, 8
        %s334 = scalar_lea.vmem [#allocation2], %s333
        // Predicated region
        $region37: #{tpu_custom_call.1} parent=35 // pred_check
          %p335 = pneg %p76
        $region38: #{tpu_custom_call.1} parent=35 // pred_check_branch
          %337 = sbr.rel (%p335) target = $region40
        $region39: #{tpu_custom_call.1} parent=35 // pred_region
          %339 = dma.done %s331, 128
        $region40: #{tpu_custom_call.1} parent=35 // pred_fallthru
          _
        %s340 = sand.u32 %s32, 1
        %s341 = scalar_lea.sflag [#allocation6], %s340
        %s342 = sand.u32 %s91, 1
        %s343 = smul.addr %s342, 8
        %s344 = scalar_lea.vmem [#allocation5], %s343
        // Predicated region
        $region41: #{tpu_custom_call.1} parent=35 // pred_check
          %p345 = pneg %p104
        $region42: #{tpu_custom_call.1} parent=35 // pred_check_branch
          %347 = sbr.rel (%p345) target = $region44
        $region43: #{tpu_custom_call.1} parent=35 // pred_region
          %349 = dma.done %s341, 128
        $region44: #{tpu_custom_call.1} parent=35 // pred_fallthru
          _
        %s350 = sand.u32 %s32, 1
        %s351 = scalar_lea.sflag [#allocation6], %s350
        %s352 = sand.u32 %s119, 1
        %s353 = smul.addr %s352, 8
        %s354 = scalar_lea.vmem [#allocation7], %s353
        // Predicated region
        $region45: #{tpu_custom_call.1} parent=35 // pred_check
          %p355 = pneg %p132
        $region46: #{tpu_custom_call.1} parent=35 // pred_check_branch
          %357 = sbr.rel (%p355) target = $region48
        $region47: #{tpu_custom_call.1} parent=35 // pred_region
          %359 = dma.done %s351, 128
        $region48: #{tpu_custom_call.1} parent=35 // pred_fallthru
          _
        %s360 = sand.u32 %s147, 1
        %s361 = scalar_lea.sflag [#allocation9], %s360
        %s362 = sand.u32 %s147, 1
        %s363 = smul.addr %s362, 2
        %s364 = scalar_lea.vmem [#allocation8], %s363
        // Predicated region
        $region49: #{tpu_custom_call.1} parent=35 // pred_check
          %p365 = pneg %p160
        $region50: #{tpu_custom_call.1} parent=35 // pred_check_branch
          %367 = sbr.rel (%p365) target = $region52
        $region51: #{tpu_custom_call.1} parent=35 // pred_region
          %369 = dma.done %s361, 32
        $region52: #{tpu_custom_call.1} parent=35 // pred_fallthru
          _
        %s370 = sand.u32 %s63, 1
        %s371 = scalar_lea.sflag [#allocation3], %s370
        %s372 = sand.u32 %s63, 1
        %s373 = smul.addr %s372, 8
        %s374 = scalar_lea.vmem [#allocation2], %s373
        %p375 = pneg %p76
        %p376 = pneg %p73
        %s377 = sand.u32 %s32, 1
        %s378 = scalar_lea.sflag [#allocation6], %s377
        %s379 = sand.u32 %s91, 1
        %s380 = smul.addr %s379, 8
        %s381 = scalar_lea.vmem [#allocation5], %s380
        %p382 = pneg %p104
        %p383 = pneg %p101
        %s384 = sand.u32 %s32, 1
        %s385 = scalar_lea.sflag [#allocation6], %s384
        %s386 = sand.u32 %s119, 1
        %s387 = smul.addr %s386, 8
        %s388 = scalar_lea.vmem [#allocation7], %s387
        %p389 = pneg %p132
        %p390 = pneg %p129
        %s391 = sand.u32 %s147, 1
        %s392 = scalar_lea.sflag [#allocation9], %s391
        %s393 = sand.u32 %s147, 1
        %s394 = smul.addr %s393, 2
        %s395 = scalar_lea.vmem [#allocation8], %s394
        %p396 = pneg %p160
        %p397 = pneg %p157
        %p398 = pneg %p190
        %p399 = pneg %p187
        %s400 = sand.u32 %s177, 1
        %s401 = scalar_lea.sflag [#allocation4], %s400
        %s402 = sand.u32 %s177, 1
        %s403 = smul.addr %s402, 8
        %s404 = scalar_lea.vmem [#allocation10], %s403
        %p405 = pneg %p220
        %p406 = pneg %p217
        %s407 = sand.u32 %s207, 1
        %s408 = scalar_lea.sflag [#allocation12], %s407
        %s409 = sand.u32 %s207, 1
        %s410 = smul.addr %s409, 8
        %s411 = scalar_lea.vmem [#allocation11], %s410
        %v414 = vld [vmem:[%s334] sm:$0xff]
        %v415 = vld [vmem:[%s344] sm:$0xff]
        %v416 = vld [vmem:[%s354] sm:$0xff]
        %v417 = vmul.f32 %v414, 0.17677669
        %vm418 = vcmask 261120
        %v420 = vsel %vm418, %v417, 0
        %v423 = vsel %vm418, %v415, 0
        %425 = vmatpush.xpose.msra.mxu0 0.0
        %426 = vmatpush.xpose.msra.mxu0 0.0
        %427 = vmatpush.xpose.msra.mxu0 0.0
        %428 = vmatpush.xpose.msra.mxu0 0.0
        %429 = vmatpush.xpose.msra.mxu0 0.0
        %430 = vmatpush.xpose.msra.mxu0 0.0
        %431 = vmatpush.xpose.msra.mxu0 0.0
        %432 = vmatpush.xpose.msra.mxu0 0.0
        %433 = vmatpush.xpose.msra.mxu0 0.0
        %434 = vmatpush.xpose.msra.mxu0 0.0
        %435 = vmatpush.xpose.msra.mxu0 0.0
        %436 = vmatpush.xpose.msra.mxu0 0.0
        %437 = vmatpush.xpose.msra.mxu0 0.0
        %438 = vmatpush.xpose.msra.mxu0 0.0
        %439 = vmatpush.xpose.msra.mxu0 0.0
        %440 = vmatpush.xpose.msra.mxu0 %v423
        %441 = vmatmul.f32.gmra.mxu0 %v420
        %v442 = vpop.f32.mrf.mxu0
        %v443 = vadd.f32 0.0, %v442
        %444 = vdwg.mxu0
        %v445 = vld [vmem:[%s364] sm:$0x3]
        %vm446 = vnez %v445
        %v447 = vsel %vm446, 16843009, 0
        %v448 = vunpack.c.0.s8 %v447
        %vm449 = vcmp.ne.s32.totalorder %v448, 0
        %v450 = vsel %vm449, -1e+09, %v443
        %vm451 = vcmask 64512
        %v452 = vsel %vm451, %v450, -inf
        %453 = vmax.xlane.f32.xlu0 %v452
        %v454 = vpop.xlane.xlu0 %453
        %v455 = vsub.f32 %v450, %v454
        %v456 = vmul.f32 %v455, 1.442695
        %v457 = vpow.pop %v456
        %v458 = vsel %vm451, %v457, 0.0
        %459 = vadd.xlane.f32.xlu0 %v458
        %v460 = vpop.xlane.xlu0 %459
        %v461 = vrcp.pop %v460
        %v462 = vmul.f32 %v457, %v461
        %v464 = vsel %vm451, %v462, 0
        %466 = vmatpush.msra.mxu0 0.0
        %467 = vmatpush.msra.mxu0 0.0
        %468 = vmatpush.msra.mxu0 0.0
        %469 = vmatpush.msra.mxu0 0.0
        %470 = vmatpush.msra.mxu0 0.0
        %471 = vmatpush.msra.mxu0 0.0
        %472 = vmatpush.msra.mxu0 0.0
        %473 = vmatpush.msra.mxu0 0.0
        %474 = vmatpush.msra.mxu0 0.0
        %475 = vmatpush.msra.mxu0 0.0
        %476 = vmatpush.msra.mxu0 0.0
        %477 = vmatpush.msra.mxu0 0.0
        %478 = vmatpush.msra.mxu0 0.0
        %479 = vmatpush.msra.mxu0 0.0
        %480 = vmatpush.msra.mxu0 0.0
        %481 = vmatpush.msra.mxu0 %v416
        %482 = vmatmul.f32.gmra.mxu0 %v464
        %v483 = vpop.f32.mrf.mxu0
        %v484 = vadd.f32 0.0, %v483
        %485 = vdwg.mxu0
        %486 = vst.msk [vmem:[%s404] sm:$0xff] %vm418, %v484
        %487 = vst.msk [vmem:[%s411] sm:$0xff] %vm451, %v462
        %s488 = sand.u32 %s177, 1
        %s489 = scalar_lea.sflag [#allocation4], %s488
        %s490 = sand.u32 %s177, 1
        %s491 = smul.addr %s490, 8
        %s492 = scalar_lea.vmem [#allocation10], %s491
        %s493 = sand.u32 %s207, 1
        %s494 = scalar_lea.sflag [#allocation12], %s493
        %s495 = sand.u32 %s207, 1
        %s496 = smul.addr %s495, 8
        %s497 = scalar_lea.vmem [#allocation11], %s496
        // Predicated region
        $region53: #{tpu_custom_call.1} parent=35 // pred_check
          %p498 = pneg %p187
        $region54: #{tpu_custom_call.1} parent=35 // pred_check_branch
          %500 = sbr.rel (%p498) target = $region56
        $region55: #{tpu_custom_call.1} parent=35 // pred_region
          %502 = vsyncadd %s489, 0
          %s503 = sadd.s32 %s39, %s38
          %s504 = smul.addr %s37, 2
          %s505 = sadd.s32 %s503, %s504
          %s506 = smul.addr %s505, 8
          %s507 = scalar_lea.hbm %s4, %s506
          %s509 = sshll.u32 %s492, 4
          %s510 = int_to_ptr.vmem [resolvable:$true] %s509
          %s511 = sshll.u32 %s507, 4
          %s512 = int_to_ptr.hbm [resolvable:$true] %s511
          %514 = dma.vmem_to_hbm [thread:$0]  %s510, 128, %s512, %s489
        $region56: #{tpu_custom_call.1} parent=35 // pred_fallthru
          _
        // Predicated region
        $region57: #{tpu_custom_call.1} parent=35 // pred_check
          %p515 = pneg %p217
        $region58: #{tpu_custom_call.1} parent=35 // pred_check_branch
          %517 = sbr.rel (%p515) target = $region60
        $region59: #{tpu_custom_call.1} parent=35 // pred_region
          %519 = vsyncadd %s494, 0
          %s520 = sadd.s32 %s39, %s38
          %s521 = smul.addr %s37, 2
          %s522 = sadd.s32 %s520, %s521
          %s523 = smul.addr %s522, 8
          %s524 = scalar_lea.hbm %s5, %s523
          %s526 = sshll.u32 %s497, 4
          %s527 = int_to_ptr.vmem [resolvable:$true] %s526
          %s528 = sshll.u32 %s524, 4
          %s529 = int_to_ptr.hbm [resolvable:$true] %s528
          %531 = dma.vmem_to_hbm [thread:$0]  %s527, 128, %s529, %s494
        $region60: #{tpu_custom_call.1} parent=35 // pred_fallthru
          _
      $region36: #{tpu_custom_call.1} parent=5 // pred_fallthru
        _
      %p532 = scmp.le.s32.totalorder 2, %s27
      // Predicated region
      $region61: #{tpu_custom_call.1} parent=5 // pred_check
        %p533 = pneg %p532
      $region62: #{tpu_custom_call.1} parent=5 // pred_check_branch
        %535 = sbr.rel (%p533) target = $region64
      $region63: #{tpu_custom_call.1} parent=5 // pred_region
        %s536 = ssub.s32 %s27, 2
        // Predicated region
        $region65: #{tpu_custom_call.1} parent=63 // pred_check
          %p537 = pneg %p193
        $region66: #{tpu_custom_call.1} parent=63 // pred_check_branch
          %539 = sbr.rel (%p537) target = $region68
        $region67: #{tpu_custom_call.1} parent=63 // pred_region
          %s540 = sand.u32 %s178, 1
          %s541 = scalar_lea.sflag [#allocation4], %s540
          %s542 = sand.u32 %s178, 1
          %s543 = smul.addr %s542, 8
          %s544 = scalar_lea.vmem [#allocation10], %s543
          %546 = dma.done %s541, 128
        $region68: #{tpu_custom_call.1} parent=63 // pred_fallthru
          _
        // Predicated region
        $region69: #{tpu_custom_call.1} parent=63 // pred_check
          %p547 = pneg %p223
        $region70: #{tpu_custom_call.1} parent=63 // pred_check_branch
          %549 = sbr.rel (%p547) target = $region72
        $region71: #{tpu_custom_call.1} parent=63 // pred_region
          %s550 = sand.u32 %s208, 1
          %s551 = scalar_lea.sflag [#allocation12], %s550
          %s552 = sand.u32 %s208, 1
          %s553 = smul.addr %s552, 8
          %s554 = scalar_lea.vmem [#allocation11], %s553
          %556 = dma.done %s551, 128
        $region72: #{tpu_custom_call.1} parent=63 // pred_fallthru
          _
      $region64: #{tpu_custom_call.1} parent=5 // pred_fallthru
        _
    $region6: #{tpu_custom_call.1} parent=1 // loop_footer
      %s31 = sadd.s32 1, %s27
    $region7: #{tpu_custom_call.1} parent=1 // loop_footer_branch
      %26 = sbr.rel target = $region3
    $region8: #{tpu_custom_call.1} parent=1 // loop_exit
      _
    %557 = vsyncpa [#allocation3], 1
    %s558 = scalar_lea.sflag [#allocation3], 1
    %559 = vsyncpa %s558, 1
    %560 = vsyncpa [#allocation6], 1
    %s561 = scalar_lea.sflag [#allocation6], 1
    %562 = vsyncpa %s561, 1
    %563 = vsyncpa [#allocation9], 1
    %s564 = scalar_lea.sflag [#allocation9], 1
    %565 = vsyncpa %s564, 1
    %566 = vsyncpa [#allocation4], 1
    %s567 = scalar_lea.sflag [#allocation4], 1
    %568 = vsyncpa %s567, 1
    %569 = vsyncpa [#allocation12], 1
    %s570 = scalar_lea.sflag [#allocation12], 1
    %571 = vsyncpa %s570, 1

</llo_original>
